<compile_context>
chip_gen: v6e
topology: v6e:2x2x1
jax: 0.10.0
libtpu: 0.0.40
codegen_flags: <defaults>
</compile_context>

<pallas_src>
import jax
import jax.numpy as jnp
from jax.experimental import pallas as pl
from jax.experimental.pallas import tpu as pltpu


def actnorm_kernel(x_ref, params_ref, z_ref):
    # x_ref     : (tile_rows, H*W) f32, spatial on the lane axis
    # params_ref: (tile_rows, 2)   f32, col 0 = bias, col 1 = 1/scale (per (n, c) row)
    # z_ref     : (tile_rows, H*W) out dtype
    bias = params_ref[:, 0:1]       # (tile_rows, 1)
    inv_scale = params_ref[:, 1:2]  # (tile_rows, 1)
    z_ref[...] = ((x_ref[...] - bias) * inv_scale).astype(z_ref.dtype)


def _choose_tile_rows(rows, hw, target_block_bytes):
    """Largest row-tile (multiple of 8 sublanes) with ~target_block_bytes of f32."""
    per_row_bytes = hw * 4
    t = max(1, target_block_bytes // per_row_bytes)
    t = max(8, (t // 8) * 8)
    return rows if t >= rows else int(t)


def actnorm_forward(x, scale, bias, *, out_dtype=None, target_block_bytes=2 << 20):
    """x: (N, C, H, W). scale, bias: broadcastable to (1, C, 1, 1).
    Returns (z [N, C, H, W], logdet scalar), matching the PyTorch forward of an
    initialized Actnorm layer (reciprocal-multiply differs from IEEE division
    by ~1 ulp)."""
    N, C, H, W = x.shape
    HW = H * W
    rows = N * C
    out_dtype = x.dtype if out_dtype is None else out_dtype

    scale_c = scale.reshape(C).astype(jnp.float32)   # (C,)
    bias_c = bias.reshape(C).astype(jnp.float32)     # (C,)

    # logdet is parameter-only (O(C)); computed here per the perf review so the
    # kernel needs no SMEM scalar output or per-channel scale input.
    logdet = -jnp.sum(jnp.log(jnp.abs(scale_c))) * jnp.float32(HW)

    # Free reshape of NCHW: (n, c) rows on sublanes, spatial on lanes.
    x_flat = x.astype(jnp.float32).reshape(rows, HW)

    # Tiny param prep (rows * 8 B): per-row bias and reciprocal scale, packed
    # into a single operand (one DMA).  Row order matches n*C + c of x_flat.
    inv_c = 1.0 / scale_c
    params = jnp.stack([jnp.tile(bias_c, (N,)), jnp.tile(inv_c, (N,))], axis=1)

    tile_rows = _choose_tile_rows(rows, HW, target_block_bytes)
    grid = (pl.cdiv(rows, tile_rows),)

    # VMEM budget: double-buffered input + output blocks, packed params, headroom.
    block_bytes = tile_rows * HW * 4
    out_block_bytes = tile_rows * HW * jnp.dtype(out_dtype).itemsize
    vmem_budget = 2 * (block_bytes + out_block_bytes) + 2 * tile_rows * 2 * 4 + (1 << 20)
    vmem_budget = int(min(max(vmem_budget, 4 << 20), 64 << 20))

    z_flat = pl.pallas_call(
        actnorm_kernel,
        out_shape=jax.ShapeDtypeStruct((rows, HW), out_dtype),
        grid_spec=pltpu.PrefetchScalarGridSpec(
            num_scalar_prefetch=0,
            grid=grid,
            in_specs=[
                pl.BlockSpec((tile_rows, HW), lambda i: (i, 0)),
                pl.BlockSpec((tile_rows, 2), lambda i: (i, 0)),
            ],
            out_specs=pl.BlockSpec((tile_rows, HW), lambda i: (i, 0)),
        ),
        compiler_params=pltpu.CompilerParams(
            # Row tiles are disjoint -> parallel; shards across v7x's 2 TCs,
            # harmless on single-TC v5e/v6e.
            dimension_semantics=("parallel",),
            vmem_limit_bytes=vmem_budget,
        ),
        cost_estimate=pl.CostEstimate(
            flops=2 * rows * HW,
            transcendentals=0,
            bytes_accessed=rows * HW * 4 + rows * HW * jnp.dtype(out_dtype).itemsize
            + rows * 2 * 4,
        ),
    )(x_flat, params)

    z = z_flat.reshape(N, C, H, W).astype(out_dtype)
    return z, logdet


def actnorm_data_init(x):
    """Data-dependent init of the first PyTorch forward() call:
    bias <- per-channel mean over (N, H, W); scale <- population std + 1e-6."""
    # TODO(synk): the stateful `initialized` buffer / in-place nn.Parameter
    # update has no Pallas equivalent; the init statistics are computed here
    # as a one-time pure-JAX helper and passed to the kernel as parameters.
    C = x.shape[1]
    xc = jnp.transpose(x, (1, 0, 2, 3)).reshape(C, -1)
    bias = jnp.mean(xc, axis=1)
    scale = jnp.std(xc, axis=1) + 1e-6    # unbiased=False (population std)
    return scale, bias


def actnorm_reference(x, scale, bias):
    """Pure-JAX reference matching the (initialized) PyTorch forward exactly."""
    s = scale.reshape(1, -1, 1, 1)
    b = bias.reshape(1, -1, 1, 1)
    z = (x - b) / s
    logdet = -jnp.sum(jnp.log(jnp.abs(scale))) * x.shape[2] * x.shape[3]
    return z, logdet


if __name__ == "__main__":
    N, C, H, W = 2, 4, 16, 16
    key = jax.random.PRNGKey(0)
    k1, k2, k3 = jax.random.split(key, 3)

    x = 2.0 * jax.random.normal(k1, (N, C, H, W), jnp.float32) + 0.5

    # Path 1: first-call semantics (data-dependent init + normalize), i.e. the
    # PyTorch module with default parameters on its very first forward().
    scale_init, bias_init = actnorm_data_init(x)
    z1, ld1 = actnorm_forward(x, scale_init, bias_init)
    jax.block_until_ready((z1, ld1))
    z1_ref, ld1_ref = actnorm_reference(x, scale_init, bias_init)
    assert z1.shape == (N, C, H, W)
    assert jnp.allclose(z1, z1_ref, atol=1e-5, rtol=1e-5)
    assert jnp.allclose(ld1, ld1_ref, atol=1e-4, rtol=1e-5)

    # Path 2: already-initialized layer with arbitrary scale / bias parameters.
    scale = 0.5 + jax.random.uniform(k2, (1, C, 1, 1), dtype=jnp.float32)
    bias = jax.random.normal(k3, (1, C, 1, 1), jnp.float32)
    z2, ld2 = actnorm_forward(x, scale, bias)
    jax.block_until_ready((z2, ld2))
    z2_ref, ld2_ref = actnorm_reference(x, scale, bias)
    assert z2.shape == (N, C, H, W)
    assert jnp.allclose(z2, z2_ref, atol=1e-5, rtol=1e-5)
    assert jnp.allclose(ld2, ld2_ref, atol=1e-4, rtol=1e-5)

    print("KERNEL_OK")
</pallas_src>

<mosaic_0001>
module attributes {stable_mosaic.version = 11 : i64} {
  func.func @actnorm_kernel(%arg0: i32, %arg1: memref<8x256xf32, #tpu.memory_space<vmem>>, %arg2: memref<8x2xf32, #tpu.memory_space<vmem>>, %arg3: memref<8x256xf32, #tpu.memory_space<vmem>>) attributes {dimension_semantics = [#tpu.dimension_semantics<parallel>], iteration_bounds = array<i64: 1>, scalar_prefetch = 0 : i64, scratch_operands = 0 : i64, tpu.core_type = #tpu.core_type<tc>, window_params = [{transform_indices = @transform_0, window_bounds = array<i64: 8, 256>}, {transform_indices = @transform_1, window_bounds = array<i64: 8, 2>}, {transform_indices = @transform_2, window_bounds = array<i64: 8, 256>}]} {
    %c0 = arith.constant 0 : index
    %c0_0 = arith.constant 0 : index
    %0 = vector.load %arg2[%c0, %c0_0] : memref<8x2xf32, #tpu.memory_space<vmem>>, vector<8x1xf32>
    %c0_1 = arith.constant 0 : index
    %c1 = arith.constant 1 : index
    %1 = vector.load %arg2[%c0_1, %c1] : memref<8x2xf32, #tpu.memory_space<vmem>>, vector<8x1xf32>
    %c0_2 = arith.constant 0 : index
    %c0_3 = arith.constant 0 : index
    %2 = vector.load %arg1[%c0_2, %c0_3] : memref<8x256xf32, #tpu.memory_space<vmem>>, vector<8x256xf32>
    %3 = vector.broadcast %0 : vector<8x1xf32> to vector<8x256xf32>
    %4 = arith.subf %2, %3 : vector<8x256xf32>
    %5 = vector.broadcast %1 : vector<8x1xf32> to vector<8x256xf32>
    %6 = arith.mulf %4, %5 : vector<8x256xf32>
    %c0_4 = arith.constant 0 : index
    %c0_5 = arith.constant 0 : index
    %7 = vector.load %arg3[%c0_4, %c0_5] : memref<8x256xf32, #tpu.memory_space<vmem>>, vector<8x256xf32>
    tpu.vector_store %arg3[%c0_4, %c0_5], %6 {strides = array<i32>} : memref<8x256xf32, #tpu.memory_space<vmem>>, vector<8x256xf32>,
    return
  }
  func.func @transform_0(%arg0: i32) -> (i32, i32) {
    %c0_i32 = arith.constant 0 : i32
    %c0_i32_0 = arith.constant 0 : i32
    return %arg0, %c0_i32 : i32, i32
  }
  func.func @transform_1(%arg0: i32) -> (i32, i32) {
    %c0_i32 = arith.constant 0 : i32
    %c0_i32_0 = arith.constant 0 : i32
    return %arg0, %c0_i32 : i32, i32
  }
  func.func @transform_2(%arg0: i32) -> (i32, i32) {
    %c0_i32 = arith.constant 0 : i32
    %c0_i32_0 = arith.constant 0 : i32
    return %arg0, %c0_i32 : i32, i32
  }
}

</mosaic_0001>

<llo_original>
// kernel: tpu_custom_call.1
$region0: #{tpu_custom_call.1}
  #allocation0 [shape = 'u32[]', space=smem, size = 0x4, offset = 0x4, fixed_abs, tag = 'smem constant byte address 0x4 - core index']
  #allocation1 [shape = 'u32[144,128]{1,0:T(1,128)}', space=vmem, size = 0x12000, scoped, tag = 'internal scratch']
  %s0 = inlined_call_operand.hbm [shape: f32[8,256], index: 0, kind: input, shape index: {}]
  %s1 = inlined_call_operand.vmem [shape: f32[8,2], index: 1, kind: input, shape index: {}]
  %s2 = inlined_call_operand.hbm [shape: f32[8,256], index: 2, kind: output, shape index: {}]
  %s3 = sld [smem:[#allocation0]]
  $region22: #{tpu_custom_call.1} parent=0
    _
  %s5 = ssub.s32 1, %s3
  %s6 = scalar_select 0, %s5, %s3
  $region1: #{tpu_custom_call.1} parent=0
    #allocation2 [shape = 'u8[8192]{0}', space=vmem, size = 0x2000, scoped, tag = 'input window, operand 0, single buffered']
    #allocation3 [shape = 's32[1]{0}', space=sflag, size = 0x4, scoped, tag = 'scoped memory for tpu_custom_call.1']
    #allocation4 [shape = 's32[1]{0}', space=sflag, size = 0x4, scoped, tag = 'scoped memory for tpu_custom_call.1']
    #allocation5 [shape = 'u8[8192]{0}', space=vmem, size = 0x2000, scoped, tag = 'output window, operand 0, single buffered']
    %7 = vsyncpa [#allocation3], 0
    %8 = vsyncpa [#allocation4], 0
    // Predicated region
    $region2: #{tpu_custom_call.1} parent=1 // pred_check
      _
    $region3: #{tpu_custom_call.1} parent=1 // pred_check_branch
      %10 = sbr.rel (0) target = $region5
    $region4: #{tpu_custom_call.1} parent=1 // pred_region
      %s12 = ssub.s32 256, 256
      %13 = vsyncadd [#allocation3], %s12
      %s15 = sshll.u32 [#allocation2], 4
      %s16 = int_to_ptr.vmem [resolvable:$true] %s15
      %18 = dma.hbm_to_vmem [thread:$0]  %s0, 256, %s16, [#allocation3]
    $region5: #{tpu_custom_call.1} parent=1 // pred_fallthru
      _
    // Predicated region
    $region6: #{tpu_custom_call.1} parent=1 // pred_check
      _
    $region7: #{tpu_custom_call.1} parent=1 // pred_check_branch
      %20 = sbr.rel (0) target = $region9
    $region8: #{tpu_custom_call.1} parent=1 // pred_region
      _
    $region9: #{tpu_custom_call.1} parent=1 // pred_fallthru
      _
    // Predicated region
    $region10: #{tpu_custom_call.1} parent=1 // pred_check
      _
    $region11: #{tpu_custom_call.1} parent=1 // pred_check_branch
      %22 = sbr.rel (0) target = $region13
    $region12: #{tpu_custom_call.1} parent=1 // pred_region
      %23 = dma.done [#allocation3], 256
    $region13: #{tpu_custom_call.1} parent=1 // pred_fallthru
      _
    %v24 = vld [vmem:[%s1] sm:$0xff]
    %v25 = vld [vmem:[#allocation2] sm:$0xff]
    %v26 = vld [vmem:[#allocation2 + $0x8] sm:$0xff]
    %28 = vset.pattern.permute.xlu0 0
    %29 = vperm.xlu0 %28, %v24
    %v30 = vpop.permute.xlu0 %29
    %v32 = vsub.f32 %v25, %v30
    %v33 = vsub.f32 %v26, %v30
    %34 = vset.pattern.permute.xlu0 1
    %35 = vperm.xlu0 %34, %v24
    %v36 = vpop.permute.xlu0 %35
    %v38 = vmul.f32 %v32, %v36
    %v39 = vmul.f32 %v33, %v36
    %40 = vst [vmem:[#allocation5] sm:$0xff] %v38
    %41 = vst [vmem:[#allocation5 + $0x8] sm:$0xff] %v39
    // Predicated region
    $region14: #{tpu_custom_call.1} parent=1 // pred_check
      _
    $region15: #{tpu_custom_call.1} parent=1 // pred_check_branch
      %43 = sbr.rel (0) target = $region17
    $region16: #{tpu_custom_call.1} parent=1 // pred_region
      %s45 = ssub.s32 256, 256
      %46 = vsyncadd [#allocation4], %s45
      %s48 = sshll.u32 [#allocation5], 4
      %s49 = int_to_ptr.vmem [resolvable:$true] %s48
      %51 = dma.vmem_to_hbm [thread:$0]  %s49, 256, %s2, [#allocation4]
    $region17: #{tpu_custom_call.1} parent=1 // pred_fallthru
      _
    // Predicated region
    $region18: #{tpu_custom_call.1} parent=1 // pred_check
      _
    $region19: #{tpu_custom_call.1} parent=1 // pred_check_branch
      %53 = sbr.rel (0) target = $region21
    $region20: #{tpu_custom_call.1} parent=1 // pred_region
      %54 = dma.done [#allocation4], 256
    $region21: #{tpu_custom_call.1} parent=1 // pred_fallthru
      _
    %55 = vsyncpa [#allocation3], 1
    %56 = vsyncpa [#allocation4], 1

</llo_original>
